<compile_context>
chip_gen: v7x
topology: tpu7x:2x2x1
jax: 0.10.0
libtpu: 0.0.40
codegen_flags: <defaults>
</compile_context>

<pallas_src>
import functools
import math

import jax
import jax.numpy as jnp
from jax.experimental import pallas as pl
from jax.experimental.pallas import tpu as pltpu

ALPHA = 0.25
GAMMA = 2.0
LANES = 128
SUBLANES = 8
MAX_BLOCK_ROWS = 8192  # (8192, 128) f32 = 4 MiB per input per block


def _cdiv(a, b):
    return (a + b - 1) // b


def _round_up(a, b):
    return _cdiv(a, b) * b


def _focal_loss_kernel(logits_ref, label_ref, out_ref, *, alpha, gamma,
                       total, block_elems, needs_mask):
    c = pl.program_id(0)
    t = pl.program_id(1)

    # Output block is resident across the reduction axis t: init once.
    @pl.when(t == 0)
    def _():
        out_ref[...] = jnp.zeros_like(out_ref)

    x = logits_ref[...].astype(jnp.float32)
    y = label_ref[...].astype(jnp.float32)

    # One shared e = exp(-|x|) gives a numerically stable sigmoid and the
    # softplus term with minimal EUP traffic:
    #   sigmoid(x)        = x >= 0 ? 1/(1+e) : 1 - 1/(1+e)
    #   log(sigmoid(x))   = min(x, 0) - log(1+e)
    #   log(1-sigmoid(x)) = -max(x, 0) - log(1+e)
    e = jnp.exp(-jnp.abs(x))
    one_plus_e = 1.0 + e
    # Approximate reciprocal runs in the EUP slot (which has slack here);
    # ~2^-14 relative error on probs, fine for a scalar loss.
    r = pl.reciprocal(one_plus_e, approx=True)
    probs = jnp.where(x >= 0.0, r, 1.0 - r)
    sp = jnp.log(one_plus_e)

    # ce = a*log_probs + b*log_1_probs, with a = alpha*y, b = (1-alpha)*(1-y)
    #    = a*min(x,0) - b*max(x,0) - (a+b)*sp
    a = alpha * y
    b = (1.0 - alpha) * (1.0 - y)
    ce = a * jnp.minimum(x, 0.0) - b * jnp.maximum(x, 0.0) - (a + b) * sp

    d = y - probs
    if gamma == 2.0:
        # loss = ce * (-(|d|^2)) without pow (pow lowers to exp(g*log|d|)).
        loss = -(ce * d) * d
    else:
        loss = ce * (-jnp.power(jnp.abs(d), gamma))

    def _accum(vals):
        # Fold (block_rows, 128) -> (1, 8, 128) with VPU adds; the accumulator
        # stays vreg-shaped, the single cross-lane reduce happens in the
        # wrapper on a tiny (n_chunks, 8, 128) array.
        out_ref[...] += vals.reshape(1, -1, SUBLANES, LANES).sum(axis=1)

    if needs_mask:
        # Only the globally-last block can be ragged (overhang past `total`);
        # pay for the mask only there.
        is_last = jnp.logical_and(c == pl.num_programs(0) - 1,
                                  t == pl.num_programs(1) - 1)

        @pl.when(is_last)
        def _():
            base = (c * pl.num_programs(1) + t) * block_elems
            ridx = jax.lax.broadcasted_iota(jnp.int32, loss.shape, 0)
            cidx = jax.lax.broadcasted_iota(jnp.int32, loss.shape, 1)
            idx = base + ridx * LANES + cidx
            _accum(jnp.where(idx < total, loss, 0.0))

        @pl.when(jnp.logical_not(is_last))
        def _():
            _accum(loss)
    else:
        _accum(loss)


def focal_loss_v2(logits, label, alpha=ALPHA, gamma=GAMMA, reduction="mean",
                  max_block_rows=MAX_BLOCK_ROWS):
    """Sigmoid focal loss over all elements of `logits`/`label` (any shape)."""
    assert logits.shape == label.shape
    if reduction not in ("mean", "sum"):
        # TODO(synk): reduction='none' (full elementwise output) not implemented.
        raise NotImplementedError("only 'mean' and 'sum' reductions supported")

    total = math.prod(logits.shape)
    assert 0 < total < 2**31, "int32 element-index masking limit"
    assert max_block_rows % 32 == 0

    flat_x = logits.reshape(-1)
    flat_y = label.reshape(-1)

    # Zero-copy path when total is lane-aligned (the common NCHW case).  Only
    # when total % 128 != 0 do we pad by <128 elements so the lane-dense
    # reshape is possible; the padded values are irrelevant (masked in-kernel).
    pad = (-total) % LANES
    if pad:
        flat_x = jnp.pad(flat_x, (0, pad))
        flat_y = jnp.pad(flat_y, (0, pad))
    rows = (total + pad) // LANES

    # Multiple of 32 keeps f32/bf16/int8 sublane tiling legal even when the
    # block overhangs the row dim (overhang is masked in-kernel).
    block_rows = min(max_block_rows, _round_up(rows, 32))
    n_tiles = _cdiv(rows, block_rows)
    # Outer "parallel" chunk axis so both TensorCores stream HBM on v7x.
    # Only chunk when the tile count splits evenly (keeps every block index
    # in-range, no fully-out-of-bounds blocks).
    n_chunks = 2 if (n_tiles >= 2 and n_tiles % 2 == 0) else 1
    tiles_per_chunk = n_tiles // n_chunks

    needs_mask = (n_tiles * block_rows * LANES != total)

    # Keep native dtype here (no wrapper astype); widen inside the kernel.
    x2 = flat_x.reshape(rows, LANES)
    y2 = flat_y.reshape(rows, LANES)

    kernel = functools.partial(
        _focal_loss_kernel, alpha=float(alpha), gamma=float(gamma),
        total=total, block_elems=block_rows * LANES, needs_mask=needs_mask)

    in_idx = lambda c, t: (c * tiles_per_chunk + t, 0)

    partials = pl.pallas_call(
        kernel,
        out_shape=jax.ShapeDtypeStruct((n_chunks, SUBLANES, LANES),
                                       jnp.float32),
        grid_spec=pltpu.PrefetchScalarGridSpec(
            num_scalar_prefetch=0,
            grid=(n_chunks, tiles_per_chunk),
            in_specs=[
                pl.BlockSpec((block_rows, LANES), in_idx),
                pl.BlockSpec((block_rows, LANES), in_idx),
            ],
            out_specs=pl.BlockSpec((1, SUBLANES, LANES),
                                   lambda c, t: (c, 0, 0)),
        ),
        compiler_params=pltpu.CompilerParams(
            dimension_semantics=("parallel", "arbitrary"),
            # 16 MiB of double-buffered input blocks + headroom; v5e's default
            # scoped limit is only 16 MiB, v7x physical VMEM is 64 MiB.
            vmem_limit_bytes=48 * 1024 * 1024),
    )(x2, y2)

    total_sum = jnp.sum(partials)
    if reduction == "sum":
        return total_sum
    return total_sum / jnp.float32(total)


def _focal_loss_ref(logits, label, alpha=ALPHA, gamma=GAMMA, reduction="mean"):
    x = logits.astype(jnp.float32)
    y = label.astype(jnp.float32)
    probs = jax.nn.sigmoid(x)
    coeff = -jnp.power(jnp.abs(y - probs), gamma)
    log_probs = jax.nn.log_sigmoid(x)
    log_1_probs = jax.nn.log_sigmoid(-x)
    ce = alpha * y * log_probs + (1.0 - alpha) * (1.0 - y) * log_1_probs
    loss = ce * coeff
    return jnp.sum(loss) if reduction == "sum" else jnp.mean(loss)


if __name__ == "__main__":
    key = jax.random.PRNGKey(0)
    keys = jax.random.split(key, 10)

    # Tolerance accounts for the approximate (EUP) reciprocal (~2^-14 relative
    # on probs) plus accumulation-order differences.
    RTOL, ATOL = 2e-3, 1e-6

    def check(logits, label, reduction="mean", **kw):
        out = jax.block_until_ready(
            focal_loss_v2(logits, label, reduction=reduction, **kw))
        ref = jax.block_until_ready(
            _focal_loss_ref(logits, label, reduction=reduction))
        assert jnp.allclose(out, ref, rtol=RTOL, atol=ATOL), (out, ref)

    # 1) NCHW f32, lane-aligned element count (zero-copy path, single block).
    logits = jax.random.normal(keys[0], (2, 4, 16, 16), dtype=jnp.float32)
    label = jax.random.bernoulli(keys[1], 0.5,
                                 (2, 4, 16, 16)).astype(jnp.float32)
    check(logits, label, reduction="mean")
    check(logits, label, reduction="sum")

    # 2) Non-multiple-of-128 element count exercises the small-pad + in-kernel
    #    tail-masking path.
    logits2 = jax.random.normal(keys[2], (2, 3, 15, 17), dtype=jnp.float32)
    label2 = jax.random.bernoulli(keys[3], 0.5,
                                  (2, 3, 15, 17)).astype(jnp.float32)
    check(logits2, label2)

    # 3) Native bf16 inputs (no wrapper upcast; kernel widens in-VMEM).
    logits3 = jax.random.normal(keys[4], (2, 4, 16, 16),
                                dtype=jnp.bfloat16)
    label3 = jax.random.bernoulli(keys[5], 0.5,
                                  (2, 4, 16, 16)).astype(jnp.bfloat16)
    check(logits3, label3)

    # 4) Multi-tile, 2-chunk, exactly-divisible grid (unmasked accumulation
    #    path) — small max_block_rows to exercise the grid on small inputs.
    logits4 = jax.random.normal(keys[6], (4, 4, 32, 32), dtype=jnp.float32)
    label4 = jax.random.bernoulli(keys[7], 0.5,
                                  (4, 4, 32, 32)).astype(jnp.float32)
    check(logits4, label4, max_block_rows=64)

    # 5) Multi-tile, single-chunk grid with a ragged last tile.
    logits5 = jax.random.normal(keys[8], (4, 4, 32, 33), dtype=jnp.float32)
    label5 = jax.random.bernoulli(keys[9], 0.5,
                                  (4, 4, 32, 33)).astype(jnp.float32)
    check(logits5, label5, max_block_rows=64)

    print("KERNEL_OK")
</pallas_src>

<mosaic_0001>
module attributes {stable_mosaic.version = 11 : i64} {
  func.func @_focal_loss_kernel(%arg0: i32, %arg1: i32, %arg2: memref<32x128xf32, #tpu.memory_space<vmem>>, %arg3: memref<32x128xf32, #tpu.memory_space<vmem>>, %arg4: memref<1x8x128xf32, #tpu.memory_space<vmem>>) attributes {dimension_semantics = [#tpu.dimension_semantics<parallel>, #tpu.dimension_semantics<arbitrary>], iteration_bounds = array<i64: 1, 1>, scalar_prefetch = 0 : i64, scratch_operands = 0 : i64, tpu.core_type = #tpu.core_type<tc>, window_params = [{transform_indices = @transform_0, window_bounds = array<i64: 32, 128>}, {transform_indices = @transform_1, window_bounds = array<i64: 32, 128>}, {transform_indices = @transform_2, window_bounds = array<i64: 1, 8, 128>}]} {
    %c0_i32 = arith.constant 0 : i32
    %0 = arith.cmpi eq, %arg1, %c0_i32 : i32
    %1 = arith.extui %0 : i1 to i32
    %c0_i32_0 = arith.constant 0 : i32
    %2 = arith.cmpi ne, %1, %c0_i32_0 : i32
    scf.if %2 {
      %cst_17 = arith.constant 0.000000e+00 : f32
      %47 = vector.broadcast %cst_17 : f32 to vector<1x8x128xf32>
      %c0_18 = arith.constant 0 : index
      %c0_19 = arith.constant 0 : index
      %c0_20 = arith.constant 0 : index
      %48 = vector.load %arg4[%c0_18, %c0_19, %c0_20] : memref<1x8x128xf32, #tpu.memory_space<vmem>>, vector<1x8x128xf32>
      tpu.vector_store %arg4[%c0_18, %c0_19, %c0_20], %47 {strides = array<i32>} : memref<1x8x128xf32, #tpu.memory_space<vmem>>, vector<1x8x128xf32>,
    } else {
    }
    %c0 = arith.constant 0 : index
    %c0_1 = arith.constant 0 : index
    %3 = vector.load %arg2[%c0, %c0_1] : memref<32x128xf32, #tpu.memory_space<vmem>>, vector<32x128xf32>
    %c0_2 = arith.constant 0 : index
    %c0_3 = arith.constant 0 : index
    %4 = vector.load %arg3[%c0_2, %c0_3] : memref<32x128xf32, #tpu.memory_space<vmem>>, vector<32x128xf32>
    %5 = math.absf %3 : vector<32x128xf32>
    %cst = arith.constant 0.000000e+00 : f32
    %6 = vector.broadcast %cst : f32 to vector<32x128xf32>
    %7 = arith.subf %6, %5 : vector<32x128xf32>
    %8 = math.exp %7 : vector<32x128xf32>
    %cst_4 = arith.constant 1.000000e+00 : f32
    %9 = vector.broadcast %cst_4 : f32 to vector<32x128xf32>
    %10 = arith.addf %9, %8 : vector<32x128xf32>
    %11 = tpu.reciprocal %10 {approx = true} : vector<32x128xf32> -> vector<32x128xf32>
    %cst_5 = arith.constant 0.000000e+00 : f32
    %12 = vector.broadcast %cst_5 : f32 to vector<32x128xf32>
    %13 = arith.cmpf oge, %3, %12 : vector<32x128xf32>
    %cst_6 = arith.constant 1.000000e+00 : f32
    %14 = vector.broadcast %cst_6 : f32 to vector<32x128xf32>
    %15 = arith.subf %14, %11 : vector<32x128xf32>
    %16 = arith.select %13, %11, %15 : vector<32x128xi1>, vector<32x128xf32>
    %17 = math.log %10 : vector<32x128xf32>
    %cst_7 = arith.constant 2.500000e-01 : f32
    %18 = vector.broadcast %cst_7 : f32 to vector<32x128xf32>
    %19 = arith.mulf %18, %4 : vector<32x128xf32>
    %cst_8 = arith.constant 1.000000e+00 : f32
    %20 = vector.broadcast %cst_8 : f32 to vector<32x128xf32>
    %21 = arith.subf %20, %4 : vector<32x128xf32>
    %cst_9 = arith.constant 7.500000e-01 : f32
    %22 = vector.broadcast %cst_9 : f32 to vector<32x128xf32>
    %23 = arith.mulf %22, %21 : vector<32x128xf32>
    %cst_10 = arith.constant 0.000000e+00 : f32
    %24 = vector.broadcast %cst_10 : f32 to vector<32x128xf32>
    %25 = arith.minimumf %3, %24 : vector<32x128xf32>
    %26 = arith.mulf %19, %25 : vector<32x128xf32>
    %cst_11 = arith.constant 0.000000e+00 : f32
    %27 = vector.broadcast %cst_11 : f32 to vector<32x128xf32>
    %28 = arith.maximumf %3, %27 : vector<32x128xf32>
    %29 = arith.mulf %23, %28 : vector<32x128xf32>
    %30 = arith.subf %26, %29 : vector<32x128xf32>
    %31 = arith.addf %19, %23 : vector<32x128xf32>
    %32 = arith.mulf %31, %17 : vector<32x128xf32>
    %33 = arith.subf %30, %32 : vector<32x128xf32>
    %34 = arith.subf %4, %16 : vector<32x128xf32>
    %35 = arith.mulf %33, %34 : vector<32x128xf32>
    %cst_12 = arith.constant 0.000000e+00 : f32
    %36 = vector.broadcast %cst_12 : f32 to vector<32x128xf32>
    %37 = arith.subf %36, %35 : vector<32x128xf32>
    %38 = arith.mulf %37, %34 : vector<32x128xf32>
    %c0_i32_13 = arith.constant 0 : i32
    %39 = arith.cmpi eq, %arg0, %c0_i32_13 : i32
    %c0_i32_14 = arith.constant 0 : i32
    %40 = arith.cmpi eq, %arg1, %c0_i32_14 : i32
    %41 = arith.andi %39, %40 : i1
    %42 = arith.extui %41 : i1 to i32
    %c0_i32_15 = arith.constant 0 : i32
    %43 = arith.cmpi ne, %42, %c0_i32_15 : i32
    scf.if %43 {
      %c1_i32 = arith.constant 1 : i32
      %47 = arith.muli %arg0, %c1_i32 : i32
      %48 = arith.addi %47, %arg1 : i32
      %c4096_i32 = arith.constant 4096 : i32
      %49 = arith.muli %48, %c4096_i32 : i32
      %50 = tpu.iota {dimensions = array<i32: 0>} : vector<32x128xi32>
      %51 = tpu.iota {dimensions = array<i32: 1>} : vector<32x128xi32>
      %c128_i32 = arith.constant 128 : i32
      %52 = vector.broadcast %c128_i32 : i32 to vector<32x128xi32>
      %53 = arith.muli %50, %52 : vector<32x128xi32>
      %54 = vector.broadcast %49 : i32 to vector<32x128xi32>
      %55 = arith.addi %54, %53 : vector<32x128xi32>
      %56 = arith.addi %55, %51 : vector<32x128xi32>
      %c2048_i32 = arith.constant 2048 : i32
      %57 = vector.broadcast %c2048_i32 : i32 to vector<32x128xi32>
      %58 = arith.cmpi slt, %56, %57 : vector<32x128xi32>
      %cst_17 = arith.constant 0.000000e+00 : f32
      %59 = vector.broadcast %cst_17 : f32 to vector<32x128xf32>
      %60 = arith.select %58, %38, %59 : vector<32x128xi1>, vector<32x128xf32>
      %c0_18 = arith.constant 0 : index
      %c0_19 = arith.constant 0 : index
      %c0_20 = arith.constant 0 : index
      %61 = vector.load %arg4[%c0_18, %c0_19, %c0_20] : memref<1x8x128xf32, #tpu.memory_space<vmem>>, vector<1x8x128xf32>
      %62 = vector.shape_cast %60 : vector<32x128xf32> to vector<1x4x8x128xf32>
      %cst_21 = arith.constant dense<0.000000e+00> : vector<1x8x128xf32>
      %63 = vector.multi_reduction <add>, %62, %cst_21 [1] : vector<1x4x8x128xf32> to vector<1x8x128xf32>
      %64 = arith.addf %61, %63 : vector<1x8x128xf32>
      %c0_22 = arith.constant 0 : index
      %c0_23 = arith.constant 0 : index
      %c0_24 = arith.constant 0 : index
      %65 = vector.load %arg4[%c0_22, %c0_23, %c0_24] : memref<1x8x128xf32, #tpu.memory_space<vmem>>, vector<1x8x128xf32>
      tpu.vector_store %arg4[%c0_22, %c0_23, %c0_24], %64 {strides = array<i32>} : memref<1x8x128xf32, #tpu.memory_space<vmem>>, vector<1x8x128xf32>,
    } else {
    }
    %true = arith.constant true
    %44 = arith.xori %41, %true : i1
    %45 = arith.extui %44 : i1 to i32
    %c0_i32_16 = arith.constant 0 : i32
    %46 = arith.cmpi ne, %45, %c0_i32_16 : i32
    scf.if %46 {
      %c0_17 = arith.constant 0 : index
      %c0_18 = arith.constant 0 : index
      %c0_19 = arith.constant 0 : index
      %47 = vector.load %arg4[%c0_17, %c0_18, %c0_19] : memref<1x8x128xf32, #tpu.memory_space<vmem>>, vector<1x8x128xf32>
      %48 = vector.shape_cast %38 : vector<32x128xf32> to vector<1x4x8x128xf32>
      %cst_20 = arith.constant dense<0.000000e+00> : vector<1x8x128xf32>
      %49 = vector.multi_reduction <add>, %48, %cst_20 [1] : vector<1x4x8x128xf32> to vector<1x8x128xf32>
      %50 = arith.addf %47, %49 : vector<1x8x128xf32>
      %c0_21 = arith.constant 0 : index
      %c0_22 = arith.constant 0 : index
      %c0_23 = arith.constant 0 : index
      %51 = vector.load %arg4[%c0_21, %c0_22, %c0_23] : memref<1x8x128xf32, #tpu.memory_space<vmem>>, vector<1x8x128xf32>
      tpu.vector_store %arg4[%c0_21, %c0_22, %c0_23], %50 {strides = array<i32>} : memref<1x8x128xf32, #tpu.memory_space<vmem>>, vector<1x8x128xf32>,
    } else {
    }
    return
  }
  func.func @transform_0(%arg0: i32, %arg1: i32) -> (i32, i32) {
    %c1_i32 = arith.constant 1 : i32
    %0 = arith.muli %arg0, %c1_i32 : i32
    %1 = arith.addi %0, %arg1 : i32
    %c0_i32 = arith.constant 0 : i32
    %c0_i32_0 = arith.constant 0 : i32
    return %1, %c0_i32 : i32, i32
  }
  func.func @transform_1(%arg0: i32, %arg1: i32) -> (i32, i32) {
    %c1_i32 = arith.constant 1 : i32
    %0 = arith.muli %arg0, %c1_i32 : i32
    %1 = arith.addi %0, %arg1 : i32
    %c0_i32 = arith.constant 0 : i32
    %c0_i32_0 = arith.constant 0 : i32
    return %1, %c0_i32 : i32, i32
  }
  func.func @transform_2(%arg0: i32, %arg1: i32) -> (i32, i32, i32) {
    %c0_i32 = arith.constant 0 : i32
    %c0_i32_0 = arith.constant 0 : i32
    %c0_i32_1 = arith.constant 0 : i32
    return %arg0, %c0_i32, %c0_i32_0 : i32, i32, i32
  }
}

</mosaic_0001>

<llo_original>
// kernel: tpu_custom_call.1
$region0: #{tpu_custom_call.1}
  #allocation0 [shape = 'u32[]', space=smem, size = 0x4, offset = 0x4, fixed_abs, tag = 'smem constant byte address 0x4 - core index']
  #allocation1 [shape = 'u32[144,128]{1,0:T(1,128)}', space=vmem, size = 0x12000, scoped, tag = 'internal scratch']
  %s0 = inlined_call_operand.hbm [shape: f32[16,128], index: 0, kind: input, shape index: {}]
  %s1 = inlined_call_operand.hbm [shape: f32[16,128], index: 1, kind: input, shape index: {}]
  %s2 = inlined_call_operand.hbm [shape: f32[1,8,128], index: 2, kind: output, shape index: {}]
  %s3 = sld [smem:[#allocation0]]
  $region38: #{tpu_custom_call.1} parent=0
    _
  %s5 = ssub.s32 1, %s3
  %s6 = scalar_select 0, %s5, %s3
  $region1: #{tpu_custom_call.1} parent=0
    #allocation2 [shape = 'u8[16384]{0}', space=vmem, size = 0x4000, scoped, tag = 'input window, operand 0, single buffered']
    #allocation3 [shape = 's32[1]{0}', space=sflag, size = 0x4, scoped, tag = 'scoped memory for tpu_custom_call.1']
    #allocation4 [shape = 's32[1]{0}', space=sflag, size = 0x4, scoped, tag = 'scoped memory for tpu_custom_call.1']
    #allocation5 [shape = 'u8[16384]{0}', space=vmem, size = 0x4000, scoped, tag = 'input window, operand 1, single buffered']
    #allocation6 [shape = 's32[1]{0}', space=sflag, size = 0x4, scoped, tag = 'scoped memory for tpu_custom_call.1']
    #allocation7 [shape = 'u8[4096]{0}', space=vmem, size = 0x1000, scoped, tag = 'output window, operand 0, single buffered']
    %7 = vsyncpa [#allocation3], 0
    %8 = vsyncpa [#allocation6], 0
    %9 = vsyncpa [#allocation4], 0
    // Predicated region
    $region2: #{tpu_custom_call.1} parent=1 // pred_check
      _
    $region3: #{tpu_custom_call.1} parent=1 // pred_check_branch
      %11 = sbr.rel (0) target = $region5
    $region4: #{tpu_custom_call.1} parent=1 // pred_region
      %s12 = sadd.s32 0, 0
      %s13 = smul.u32 4, %s12
      %s14 = ssub.s32 2, %s13
      %s15 = smul.u32 128, %s14
      %s17 = ssub.s32 512, %s15
      %18 = vsyncadd [#allocation3], %s17
      %p19 = scmp.ne.s32.totalorder 0, %s15
      %s20 = smul.addr %s13, 128
      %s21 = scalar_lea.hbm %s0, %s20
      %s22 = smul.u32 8, %s14
      %s23 = sshll.u32 [#allocation2], 4
      %s24 = int_to_ptr.vmem [resolvable:$true] %s23
      %s25 = sshll.u32 %s22, 4
      %29 = dma.hbm_to_vmem [thread:$0]  (%p19), %s21, %s25, %s24, [#allocation3], 128, 128, 8
    $region5: #{tpu_custom_call.1} parent=1 // pred_fallthru
      _
    // Predicated region
    $region6: #{tpu_custom_call.1} parent=1 // pred_check
      _
    $region7: #{tpu_custom_call.1} parent=1 // pred_check_branch
      %31 = sbr.rel (0) target = $region9
    $region8: #{tpu_custom_call.1} parent=1 // pred_region
      %s32 = sadd.s32 0, 0
      %s33 = smul.u32 4, %s32
      %s34 = ssub.s32 2, %s33
      %s35 = smul.u32 128, %s34
      %s37 = ssub.s32 512, %s35
      %38 = vsyncadd [#allocation6], %s37
      %p39 = scmp.ne.s32.totalorder 0, %s35
      %s40 = smul.addr %s33, 128
      %s41 = scalar_lea.hbm %s1, %s40
      %s42 = smul.u32 8, %s34
      %s43 = sshll.u32 [#allocation5], 4
      %s44 = int_to_ptr.vmem [resolvable:$true] %s43
      %s45 = sshll.u32 %s42, 4
      %49 = dma.hbm_to_vmem [thread:$0]  (%p39), %s41, %s45, %s44, [#allocation6], 128, 128, 8
    $region9: #{tpu_custom_call.1} parent=1 // pred_fallthru
      _
    // Predicated region
    $region10: #{tpu_custom_call.1} parent=1 // pred_check
      _
    $region11: #{tpu_custom_call.1} parent=1 // pred_check_branch
      %51 = sbr.rel (0) target = $region13
    $region12: #{tpu_custom_call.1} parent=1 // pred_region
      %52 = dma.done [#allocation3], 512
    $region13: #{tpu_custom_call.1} parent=1 // pred_fallthru
      _
    // Predicated region
    $region14: #{tpu_custom_call.1} parent=1 // pred_check
      _
    $region15: #{tpu_custom_call.1} parent=1 // pred_check_branch
      %54 = sbr.rel (0) target = $region17
    $region16: #{tpu_custom_call.1} parent=1 // pred_region
      %55 = dma.done [#allocation6], 512
    $region17: #{tpu_custom_call.1} parent=1 // pred_fallthru
      _
    %s56 = sadd.s32 0, 0
    %s57 = smul.u32 4, %s56
    %s58 = ssub.s32 2, %s57
    %s59 = smul.u32 128, %s58
    %s60 = sadd.s32 0, 0
    %s61 = smul.u32 4, %s60
    %s62 = ssub.s32 2, %s61
    %s63 = smul.u32 128, %s62
    %p64 = scmp.eq.s32.totalorder 0, 0
    // Predicated region
    $region18: #{tpu_custom_call.1} parent=1 // pred_check
      %p65 = pneg %p64
    $region19: #{tpu_custom_call.1} parent=1 // pred_check_branch
      %67 = sbr.rel (%p65) target = $region21
    $region20: #{tpu_custom_call.1} parent=1 // pred_region
      %68 = vst [vmem:[#allocation7] sm:$0xff] 0.0
    $region21: #{tpu_custom_call.1} parent=1 // pred_fallthru
      _
    %v69 = vld [vmem:[#allocation2] sm:$0xff]
    %v70 = vld [vmem:[#allocation2 + $0x8] sm:$0xff]
    %v71 = vld [vmem:[#allocation2 + $0x10] sm:$0xff]
    %v72 = vld [vmem:[#allocation2 + $0x18] sm:$0xff]
    %v73 = vld [vmem:[#allocation5] sm:$0xff]
    %v74 = vld [vmem:[#allocation5 + $0x8] sm:$0xff]
    %v75 = vld [vmem:[#allocation5 + $0x10] sm:$0xff]
    %v76 = vld [vmem:[#allocation5 + $0x18] sm:$0xff]
    %v77 = vand.u32 2147483647, %v69
    %v78 = vand.u32 2147483647, %v70
    %v79 = vand.u32 2147483647, %v71
    %v80 = vand.u32 2147483647, %v72
    %v81 = vsub.f32 0.0, %v77
    %v82 = vsub.f32 0.0, %v78
    %v83 = vsub.f32 0.0, %v79
    %v84 = vsub.f32 0.0, %v80
    %v85 = vmul.f32 %v81, 1.442695
    %v86 = vpow.pop %v85
    %v87 = vmul.f32 %v82, 1.442695
    %v88 = vpow.pop %v87
    %v89 = vmul.f32 %v83, 1.442695
    %v90 = vpow.pop %v89
    %v91 = vmul.f32 %v84, 1.442695
    %v92 = vpow.pop %v91
    %v93 = vadd.f32 %v86, 1.0
    %v94 = vadd.f32 %v88, 1.0
    %v95 = vadd.f32 %v90, 1.0
    %v96 = vadd.f32 %v92, 1.0
    %v97 = vrcp.pop %v93
    %v98 = vrcp.pop %v94
    %v99 = vrcp.pop %v95
    %v100 = vrcp.pop %v96
    %vm101 = vcmp.ge.f32.partialorder %v69, 0.0
    %vm102 = vcmp.ge.f32.partialorder %v70, 0.0
    %vm103 = vcmp.ge.f32.partialorder %v71, 0.0
    %vm104 = vcmp.ge.f32.partialorder %v72, 0.0
    %v105 = vsub.f32 1.0, %v97
    %v106 = vsub.f32 1.0, %v98
    %v107 = vsub.f32 1.0, %v99
    %v108 = vsub.f32 1.0, %v100
    %v109 = vsel %vm101, %v97, %v105
    %v110 = vsel %vm102, %v98, %v106
    %v111 = vsel %vm103, %v99, %v107
    %v112 = vsel %vm104, %v100, %v108
    %v113 = vlog2.pop %v93
    %v114 = vmul.f32 %v113, 0.6931472
    %v115 = vlog2.pop %v94
    %v116 = vmul.f32 %v115, 0.6931472
    %v117 = vlog2.pop %v95
    %v118 = vmul.f32 %v117, 0.6931472
    %v119 = vlog2.pop %v96
    %v120 = vmul.f32 %v119, 0.6931472
    %v121 = vmul.f32 %v73, 0.25
    %v122 = vmul.f32 %v74, 0.25
    %v123 = vmul.f32 %v75, 0.25
    %v124 = vmul.f32 %v76, 0.25
    %v125 = vsub.f32 1.0, %v73
    %v126 = vsub.f32 1.0, %v74
    %v127 = vsub.f32 1.0, %v75
    %v128 = vsub.f32 1.0, %v76
    %v129 = vmul.f32 %v125, 0.75
    %v130 = vmul.f32 %v126, 0.75
    %v131 = vmul.f32 %v127, 0.75
    %v132 = vmul.f32 %v128, 0.75
    %v133 = vmin.f32 %v69, 0.0
    %v134 = vmin.f32 %v70, 0.0
    %v135 = vmin.f32 %v71, 0.0
    %v136 = vmin.f32 %v72, 0.0
    %v137 = vmul.f32 %v121, %v133
    %v138 = vmul.f32 %v122, %v134
    %v139 = vmul.f32 %v123, %v135
    %v140 = vmul.f32 %v124, %v136
    %v141 = vmax.f32 %v69, 0.0
    %v142 = vmax.f32 %v70, 0.0
    %v143 = vmax.f32 %v71, 0.0
    %v144 = vmax.f32 %v72, 0.0
    %v145 = vmul.f32 %v129, %v141
    %v146 = vmul.f32 %v130, %v142
    %v147 = vmul.f32 %v131, %v143
    %v148 = vmul.f32 %v132, %v144
    %v149 = vsub.f32 %v137, %v145
    %v150 = vsub.f32 %v138, %v146
    %v151 = vsub.f32 %v139, %v147
    %v152 = vsub.f32 %v140, %v148
    %v153 = vadd.f32 %v121, %v129
    %v154 = vadd.f32 %v122, %v130
    %v155 = vadd.f32 %v123, %v131
    %v156 = vadd.f32 %v124, %v132
    %v157 = vmul.f32 %v153, %v114
    %v158 = vmul.f32 %v154, %v116
    %v159 = vmul.f32 %v155, %v118
    %v160 = vmul.f32 %v156, %v120
    %v161 = vsub.f32 %v149, %v157
    %v162 = vsub.f32 %v150, %v158
    %v163 = vsub.f32 %v151, %v159
    %v164 = vsub.f32 %v152, %v160
    %v165 = vsub.f32 %v73, %v109
    %v166 = vsub.f32 %v74, %v110
    %v167 = vsub.f32 %v75, %v111
    %v168 = vsub.f32 %v76, %v112
    %v169 = vmul.f32 %v161, %v165
    %v170 = vmul.f32 %v162, %v166
    %v171 = vmul.f32 %v163, %v167
    %v172 = vmul.f32 %v164, %v168
    %v173 = vsub.f32 0.0, %v169
    %v174 = vsub.f32 0.0, %v170
    %v175 = vsub.f32 0.0, %v171
    %v176 = vsub.f32 0.0, %v172
    %v177 = vmul.f32 %v173, %v165
    %v178 = vmul.f32 %v174, %v166
    %v179 = vmul.f32 %v175, %v167
    %v180 = vmul.f32 %v176, %v168
    %p181 = scmp.eq.s32.totalorder 0, 0
    %p182 = pnand %p181, %p64
    %p183 = pneg %p182
    // Predicated region
    $region22: #{tpu_custom_call.1} parent=1 // pred_check
      _
    $region23: #{tpu_custom_call.1} parent=1 // pred_check_branch
      %185 = sbr.rel (%p182) target = $region25
    $region24: #{tpu_custom_call.1} parent=1 // pred_region
      %s186 = sadd.s32 0, 0
      %s187 = smul.u32 %s186, 4096
      %v188 = vlaneseq
      %v189 = vshrl.u32 %v188, 7
      %v190 = vadd.s32 %v189, 8
      %v191 = vadd.s32 %v189, 16
      %v192 = vadd.s32 %v189, 24
      %v193 = vlaneseq
      %v194 = vand.u32 %v193, 127
      %v195 = vmul.u32 %v189, 128
      %v196 = vmul.u32 %v190, 128
      %v197 = vmul.u32 %v191, 128
      %v198 = vmul.u32 %v192, 128
      %v199 = vstv %s187
      %v200 = vadd.s32 %v199, %v195
      %v201 = vadd.s32 %v199, %v196
      %v202 = vadd.s32 %v199, %v197
      %v203 = vadd.s32 %v199, %v198
      %v204 = vadd.s32 %v200, %v194
      %v205 = vadd.s32 %v201, %v194
      %v206 = vadd.s32 %v202, %v194
      %v207 = vadd.s32 %v203, %v194
      %vm208 = vcmp.lt.s32.totalorder %v204, 2048
      %vm209 = vcmp.lt.s32.totalorder %v205, 2048
      %vm210 = vcmp.lt.s32.totalorder %v206, 2048
      %vm211 = vcmp.lt.s32.totalorder %v207, 2048
      %v212 = vsel %vm208, %v177, 0.0
      %v213 = vsel %vm209, %v178, 0.0
      %v214 = vsel %vm210, %v179, 0.0
      %v215 = vsel %vm211, %v180, 0.0
      %v216 = vld [vmem:[#allocation7] sm:$0xff]
      %v217 = vadd.f32 %v212, %v213
      %v218 = vadd.f32 %v217, %v214
      %v219 = vadd.f32 %v218, %v215
      %v220 = vadd.f32 %v216, %v219
      %221 = vst [vmem:[#allocation7] sm:$0xff] %v220
    $region25: #{tpu_custom_call.1} parent=1 // pred_fallthru
      _
    %p222 = pneg %p183
    // Predicated region
    $region26: #{tpu_custom_call.1} parent=1 // pred_check
      _
    $region27: #{tpu_custom_call.1} parent=1 // pred_check_branch
      %224 = sbr.rel (%p183) target = $region29
    $region28: #{tpu_custom_call.1} parent=1 // pred_region
      %v225 = vld [vmem:[#allocation7] sm:$0xff]
      %v226 = vadd.f32 %v177, %v178
      %v227 = vadd.f32 %v226, %v179
      %v228 = vadd.f32 %v227, %v180
      %v229 = vadd.f32 %v225, %v228
      %230 = vst [vmem:[#allocation7] sm:$0xff] %v229
    $region29: #{tpu_custom_call.1} parent=1 // pred_fallthru
      _
    // Predicated region
    $region30: #{tpu_custom_call.1} parent=1 // pred_check
      _
    $region31: #{tpu_custom_call.1} parent=1 // pred_check_branch
      %232 = sbr.rel (0) target = $region33
    $region32: #{tpu_custom_call.1} parent=1 // pred_region
      %s234 = ssub.s32 128, 128
      %235 = vsyncadd [#allocation4], %s234
      %s237 = sshll.u32 [#allocation7], 4
      %s238 = int_to_ptr.vmem [resolvable:$true] %s237
      %240 = dma.vmem_to_hbm [thread:$0]  %s238, 128, %s2, [#allocation4]
    $region33: #{tpu_custom_call.1} parent=1 // pred_fallthru
      _
    // Predicated region
    $region34: #{tpu_custom_call.1} parent=1 // pred_check
      _
    $region35: #{tpu_custom_call.1} parent=1 // pred_check_branch
      %242 = sbr.rel (0) target = $region37
    $region36: #{tpu_custom_call.1} parent=1 // pred_region
      %243 = dma.done [#allocation4], 128
    $region37: #{tpu_custom_call.1} parent=1 // pred_fallthru
      _
    %244 = vsyncpa [#allocation3], 1
    %245 = vsyncpa [#allocation6], 1
    %246 = vsyncpa [#allocation4], 1

</llo_original>
